<compile_context>
chip_gen: v5e
topology: v5e:2x2
jax: 0.10.0
libtpu: 0.0.40
codegen_flags: <defaults>
</compile_context>

<pallas_src>
import functools

import jax
import jax.numpy as jnp
from jax.experimental import pallas as pl
from jax.experimental.pallas import tpu as pltpu


def _rmsnorm_kernel(x_ref, w_ref, o_ref, *, eps, inv_hidden):
    # x_ref: (rows_tile, hidden_p), w_ref: (1, hidden_p) already fp32.
    # Padding lanes (if any) are zero in both x and w, so they contribute
    # nothing to the sum and produce zeros in the output (sliced off later).
    x = x_ref[...].astype(jnp.float32)
    ss = jnp.sum(x * x, axis=-1, keepdims=True)
    inv = jax.lax.rsqrt(ss * inv_hidden + eps)
    o_ref[...] = (x * inv * w_ref[...]).astype(o_ref.dtype)


def _device_kind():
    try:
        return jax.devices()[0].device_kind.lower()
    except Exception:
        return ""


def _vmem_capacity_bytes():
    try:
        return int(pltpu.get_tpu_info().vmem_capacity_bytes)
    except Exception:
        # Generation-aware fallback: v5e/v6e have 128 MiB VMEM per TensorCore,
        # v7x has 64 MiB per TensorCore. Unknown -> conservative 64 MiB.
        kind = _device_kind()
        if "v5" in kind or "v6" in kind:
            return 128 * 1024 * 1024
        return 64 * 1024 * 1024


def _use_deep_buffering():
    # Only on v5e/v6e: plenty of VMEM and the slowest HBM, so an extra buffer
    # is cheap and hides DMA-issue gaps. On v7x (64 MiB/TC) the extra buffer
    # would steal tile VMEM on a throughput-bound pipeline -> keep depth 2.
    kind = _device_kind()
    return ("v5" in kind) or ("v6" in kind)


def _pick_rows_tile(rows, hidden_p, dtype, depth_in):
    """Pick a large, sublane-aligned row tile sized to the chip's VMEM."""
    itemsize = jnp.dtype(dtype).itemsize
    sublane = max(8, 32 // itemsize)  # 8 fp32, 16 bf16, 32 int8/fp8

    vmem_cap = _vmem_capacity_bytes()
    budget = int(vmem_cap * 0.65)  # leave headroom for compiler scratch

    # Per-row VMEM cost: depth_in input buffers + double-buffered output
    # (native dtype) plus ~2 fp32 block-sized temporaries in the body.
    per_row = hidden_p * (depth_in * itemsize + 2 * itemsize + 2 * 4)

    tile = budget // max(per_row, 1)
    # Cap the per-step input block at ~16 MiB (byte-based cap, not row count).
    tile = min(tile, (16 << 20) // max(hidden_p * itemsize, 1))

    if rows <= sublane:
        # Degenerate small input: block equals the full row extent.
        return max(rows, 1), per_row

    rows_rounded = pl.cdiv(rows, sublane) * sublane
    tile = min(tile, rows_rounded)
    # Guarantee >= 2 grid steps when there is enough work, so the "parallel"
    # row axis shards across both TensorCores on v7x.
    if rows_rounded >= 2 * sublane:
        tile = min(tile, pl.cdiv(rows_rounded, 2))
    tile = max(sublane, (tile // sublane) * sublane)
    return tile, per_row


def rmsnorm(x, weight, eps=1e-5, rows_tile=None):
    """x: (..., hidden), weight: (hidden,). Returns same shape/dtype as x."""
    orig_shape = x.shape
    hidden = orig_shape[-1]
    rows = 1
    for d in orig_shape[:-1]:
        rows *= d

    x2d = x.reshape(rows, hidden)
    # Cast weight to fp32 once here instead of every grid step in the kernel.
    w2d = weight.astype(jnp.float32).reshape(1, hidden)

    # Pad the lane dimension to a multiple of 128 so every load/store is
    # lane-dense and unmasked. Zero padding is inert for the sum-reduction.
    hidden_p = ((hidden + 127) // 128) * 128
    if hidden_p != hidden:
        x2d = jnp.pad(x2d, ((0, 0), (0, hidden_p - hidden)))
        w2d = jnp.pad(w2d, ((0, 0), (0, hidden_p - hidden)))

    itemsize = jnp.dtype(x.dtype).itemsize
    sublane = max(8, 32 // itemsize)
    depth_in = 3 if _use_deep_buffering() else 2

    if rows_tile is None:
        rows_tile, per_row = _pick_rows_tile(rows, hidden_p, x.dtype, depth_in)
    else:
        # Validate / fix user-supplied tile so the (8,128) rule holds.
        rows_tile = int(rows_tile)
        if rows_tile != rows:
            rows_tile = max(sublane, (rows_tile // sublane) * sublane)
        _, per_row = _pick_rows_tile(rows, hidden_p, x.dtype, depth_in)

    grid = (pl.cdiv(rows, rows_tile),)

    vmem_cap = _vmem_capacity_bytes()
    vmem_need = rows_tile * per_row + 4 * hidden_p * 4 + (2 << 20)
    vmem_limit = int(min(max(vmem_cap - (2 << 20), 16 << 20),
                         max(vmem_need, 32 << 20)))

    # Free scheduling hint for XLA around this HBM-bound custom call.
    cost = pl.CostEstimate(
        flops=3 * rows * hidden_p,
        transcendentals=rows,
        bytes_accessed=2 * rows * hidden_p * itemsize + hidden_p * 4,
    )

    kernel = functools.partial(
        _rmsnorm_kernel, eps=float(eps), inv_hidden=1.0 / float(hidden))

    def _build_x_spec(depth):
        if depth > 2:
            try:
                return pl.BlockSpec((rows_tile, hidden_p), lambda i: (i, 0),
                                    pipeline_mode=pl.Buffered(depth))
            except Exception:
                return pl.BlockSpec((rows_tile, hidden_p), lambda i: (i, 0))
        return pl.BlockSpec((rows_tile, hidden_p), lambda i: (i, 0))

    def _run(depth):
        return pl.pallas_call(
            kernel,
            out_shape=jax.ShapeDtypeStruct((rows, hidden_p), x.dtype),
            grid_spec=pltpu.PrefetchScalarGridSpec(
                num_scalar_prefetch=0,
                grid=grid,
                in_specs=[
                    _build_x_spec(depth),
                    pl.BlockSpec((1, hidden_p), lambda i: (0, 0)),
                ],
                out_specs=pl.BlockSpec((rows_tile, hidden_p), lambda i: (i, 0)),
            ),
            compiler_params=pltpu.CompilerParams(
                dimension_semantics=("parallel",),
                vmem_limit_bytes=vmem_limit,
            ),
            cost_estimate=cost,
        )(x2d, w2d)

    try:
        out = _run(depth_in)
    except Exception:
        if depth_in > 2:
            out = _run(2)  # fall back to default double buffering
        else:
            raise

    if hidden_p != hidden:
        out = out[:, :hidden]
    return out.reshape(orig_shape)


class TritonRMSNormJax:
    """JAX mirror of the PyTorch TritonRMSNorm module (forward only)."""

    def __init__(self, hidden_size, eps=1e-5, dtype=jnp.float32):
        self.eps = eps
        # reset_parameters(): weight initialized to ones, no bias.
        self.weight = jnp.ones((hidden_size,), dtype=dtype)

    def __call__(self, x):
        # residual=None, dropout_p=0.0, prenorm=False, return_dropout_mask=False
        return rmsnorm(x, self.weight, eps=self.eps)


def _reference(x, weight, eps):
    xf = x.astype(jnp.float32)
    ms = jnp.mean(xf * xf, axis=-1, keepdims=True)
    return (xf * jax.lax.rsqrt(ms + eps) * weight.astype(jnp.float32)).astype(x.dtype)


if __name__ == "__main__":
    root = jax.random.PRNGKey(0)
    k0, k1 = jax.random.split(root)

    # Case 1: lane-aligned hidden (main path).
    batch, seq, hidden = 2, 8, 128
    x = jax.random.normal(k0, (batch, seq, hidden), dtype=jnp.float32)
    module = TritonRMSNormJax(hidden, eps=1e-5)
    y = jax.block_until_ready(module(x))
    ref = _reference(x, module.weight, 1e-5)
    assert y.shape == x.shape and y.dtype == x.dtype
    assert jnp.allclose(y, ref, atol=1e-5, rtol=1e-5)

    # Case 2: hidden not a multiple of 128 (exercises the lane-padding path),
    # bf16 input to exercise sublane packing of 16.
    hidden2 = 96
    x2 = jax.random.normal(k1, (batch, seq, hidden2), dtype=jnp.bfloat16)
    module2 = TritonRMSNormJax(hidden2, eps=1e-5, dtype=jnp.bfloat16)
    y2 = jax.block_until_ready(module2(x2))
    ref2 = _reference(x2, module2.weight, 1e-5)
    assert y2.shape == x2.shape and y2.dtype == x2.dtype
    assert jnp.allclose(y2.astype(jnp.float32), ref2.astype(jnp.float32),
                        atol=2e-2, rtol=2e-2)

    print("KERNEL_OK")
</pallas_src>

<mosaic_0001>
module attributes {stable_mosaic.version = 11 : i64} {
  func.func @_rmsnorm_kernel(%arg0: i32, %arg1: memref<8x128xf32, #tpu.memory_space<vmem>>, %arg2: memref<1x128xf32, #tpu.memory_space<vmem>>, %arg3: memref<8x128xf32, #tpu.memory_space<vmem>>) attributes {dimension_semantics = [#tpu.dimension_semantics<parallel>], iteration_bounds = array<i64: 2>, scalar_prefetch = 0 : i64, scratch_operands = 0 : i64, tpu.core_type = #tpu.core_type<tc>, window_params = [{transform_indices = @transform_0, window_bounds = array<i64: 8, 128>}, {pipeline_mode = #tpu.pipeline_mode<synchronous>, transform_indices = @transform_1, window_bounds = array<i64: 1, 128>}, {transform_indices = @transform_2, window_bounds = array<i64: 8, 128>}]} {
    %c0 = arith.constant 0 : index
    %c0_0 = arith.constant 0 : index
    %0 = vector.load %arg1[%c0, %c0_0] : memref<8x128xf32, #tpu.memory_space<vmem>>, vector<8x128xf32>
    %1 = arith.mulf %0, %0 : vector<8x128xf32>
    %cst = arith.constant dense<0.000000e+00> : vector<8xf32>
    %2 = vector.multi_reduction <add>, %1, %cst [1] : vector<8x128xf32> to vector<8xf32>
    %3 = vector.shape_cast %2 : vector<8xf32> to vector<8x1xf32>
    %cst_1 = arith.constant 7.812500e-03 : f32
    %4 = vector.broadcast %cst_1 : f32 to vector<8x1xf32>
    %5 = arith.mulf %3, %4 : vector<8x1xf32>
    %cst_2 = arith.constant 9.99999974E-6 : f32
    %6 = vector.broadcast %cst_2 : f32 to vector<8x1xf32>
    %7 = arith.addf %5, %6 : vector<8x1xf32>
    %8 = math.rsqrt %7 : vector<8x1xf32>
    %9 = vector.broadcast %8 : vector<8x1xf32> to vector<8x128xf32>
    %10 = arith.mulf %0, %9 : vector<8x128xf32>
    %c0_3 = arith.constant 0 : index
    %c0_4 = arith.constant 0 : index
    %11 = vector.load %arg2[%c0_3, %c0_4] : memref<1x128xf32, #tpu.memory_space<vmem>>, vector<1x128xf32>
    %12 = vector.broadcast %11 : vector<1x128xf32> to vector<8x128xf32>
    %13 = arith.mulf %10, %12 : vector<8x128xf32>
    %c0_5 = arith.constant 0 : index
    %c0_6 = arith.constant 0 : index
    %14 = vector.load %arg3[%c0_5, %c0_6] : memref<8x128xf32, #tpu.memory_space<vmem>>, vector<8x128xf32>
    tpu.vector_store %arg3[%c0_5, %c0_6], %13 {strides = array<i32>} : memref<8x128xf32, #tpu.memory_space<vmem>>, vector<8x128xf32>,
    return
  }
  func.func @transform_0(%arg0: i32) -> (i32, i32) {
    %c0_i32 = arith.constant 0 : i32
    %c0_i32_0 = arith.constant 0 : i32
    return %arg0, %c0_i32 : i32, i32
  }
  func.func @transform_1(%arg0: i32) -> (i32, i32) {
    %c0_i32 = arith.constant 0 : i32
    %c0_i32_0 = arith.constant 0 : i32
    %c0_i32_1 = arith.constant 0 : i32
    return %c0_i32, %c0_i32_0 : i32, i32
  }
  func.func @transform_2(%arg0: i32) -> (i32, i32) {
    %c0_i32 = arith.constant 0 : i32
    %c0_i32_0 = arith.constant 0 : i32
    return %arg0, %c0_i32 : i32, i32
  }
}

</mosaic_0001>

<llo_original>
// kernel: tpu_custom_call.1
$region0: #{tpu_custom_call.1}
  #allocation0 [shape = 'u32[]', space=smem, size = 0x4, offset = 0x4, fixed_abs, tag = 'smem constant byte address 0x4 - core index']
  #allocation1 [shape = 'u32[72,128]{1,0:T(1,128)}', space=vmem, size = 0x9000, scoped, tag = 'internal scratch']
  %s0 = inlined_call_operand.hbm [shape: f32[16,128], index: 0, kind: input, shape index: {}]
  %s1 = inlined_call_operand.hbm [shape: f32[1,128], index: 1, kind: input, shape index: {}]
  %s2 = inlined_call_operand.hbm [shape: f32[16,128], index: 2, kind: output, shape index: {}]
  %s3 = sld [smem:[#allocation0]]
  $region49: #{tpu_custom_call.1} parent=0
    _
  %s5 = ssub.s32 1, %s3
  %s6 = scalar_select 0, %s5, %s3
  $region1: #{tpu_custom_call.1} parent=0
    #allocation2 [shape = 'u8[8192]{0}', space=vmem, size = 0x2000, scoped, tag = 'input window, operand 0']
    #allocation3 [shape = 's32[2]{0}', space=sflag, size = 0x8, scoped, tag = 'scoped memory for tpu_custom_call.1']
    #allocation4 [shape = 's32[2]{0}', space=sflag, size = 0x8, scoped, tag = 'scoped memory for tpu_custom_call.1']
    #allocation5 [shape = 'u8[512]{0}', space=vmem, size = 0x400, scoped, tag = 'input window, operand 1, single buffered']
    #allocation6 [shape = 's32[1]{0}', space=sflag, size = 0x4, scoped, tag = 'scoped memory for tpu_custom_call.1']
    #allocation7 [shape = 'u8[8192]{0}', space=vmem, size = 0x2000, scoped, tag = 'output window, operand 0']
    %7 = vsyncpa [#allocation3], 0
    %s8 = scalar_lea.sflag [#allocation3], 1
    %9 = vsyncpa %s8, 0
    %10 = vsyncpa [#allocation6], 0
    %11 = vsyncpa [#allocation4], 0
    %s12 = scalar_lea.sflag [#allocation4], 1
    %13 = vsyncpa %s12, 0
    loop: start=0, step=1, limit=4
    $region2: #{tpu_custom_call.1} parent=1 // loop_pre_header
      _
    $region3: #{tpu_custom_call.1} parent=1 // loop_header
      %s15 = sphi 0, %s19
      %p16 = scmp.ge.s32.totalorder %s15, 4
      %s25 = sphi 0, %s27
      %s28 = sphi 0, %s25
      %s29 = sphi 0, %s28
      %s45 = sphi 0, %s29
      %s49 = sphi 0, %s49
      %s51 = sphi 0, %s49
      %s52 = sphi 0, %s51
      %s66 = sphi 0, %s52
      %s72 = sphi 0, %s74
      %s75 = sphi 0, %s72
      %s76 = sphi 0, %s75
      %s92 = sphi 0, %s76
    $region4: #{tpu_custom_call.1} parent=1 // loop_header_branch
      %18 = sbr.rel (%p16) target = $region8
    $region5: #{tpu_custom_call.1} parent=1 // loop_body
      %s20 = ssub.s32 %s15, 1
      %s21 = ssub.s32 %s15, 2
      %s22 = sadd.s32 %s15, 1
      %s23 = ssub.s32 %s15, %s22
      %p24 = scmp.eq.s32.totalorder %s23, 0
      %s26 = sadd.s32 %s25, 1
      %s27 = scalar_select %p24, %s25, %s26
      %p30 = pneg %p24
      %p31 = scmp.eq.s32.totalorder %s15, 1
      %p32 = por %p30, %p31
      %p33 = scmp.ne.s32.totalorder %s25, %s28
      %p34 = scmp.eq.s32.totalorder %s15, 0
      %p35 = por %p33, %p34
      %p36 = scmp.ne.s32.totalorder %s25, %s28
      %p37 = scmp.eq.s32.totalorder %s20, 1
      %p38 = por %p36, %p37
      %p39 = scmp.ne.s32.totalorder %s28, %s29
      %p40 = scmp.eq.s32.totalorder %s20, 0
      %p41 = por %p39, %p40
      %p42 = scmp.ne.s32.totalorder %s28, %s29
      %p43 = scmp.eq.s32.totalorder %s21, 1
      %p44 = por %p42, %p43
      %p46 = scmp.ne.s32.totalorder %s29, %s45
      %p47 = scmp.eq.s32.totalorder %s21, 0
      %p48 = por %p46, %p47
      %s50 = sadd.s32 %s49, 1
      %p53 = scmp.eq.s32.totalorder %s15, 1
      %p54 = scmp.ne.s32.totalorder %s49, %s51
      %p55 = scmp.eq.s32.totalorder %s15, 0
      %p56 = por %p54, %p55
      %p57 = scmp.ne.s32.totalorder %s49, %s51
      %p58 = scmp.eq.s32.totalorder %s20, 1
      %p59 = por %p57, %p58
      %p60 = scmp.ne.s32.totalorder %s51, %s52
      %p61 = scmp.eq.s32.totalorder %s20, 0
      %p62 = por %p60, %p61
      %p63 = scmp.ne.s32.totalorder %s51, %s52
      %p64 = scmp.eq.s32.totalorder %s21, 1
      %p65 = por %p63, %p64
      %p67 = scmp.ne.s32.totalorder %s52, %s66
      %p68 = scmp.eq.s32.totalorder %s21, 0
      %p69 = por %p67, %p68
      %s70 = ssub.s32 %s15, %s22
      %p71 = scmp.eq.s32.totalorder %s70, 0
      %s73 = sadd.s32 %s72, 1
      %s74 = scalar_select %p71, %s72, %s73
      %p77 = pneg %p71
      %p78 = scmp.eq.s32.totalorder %s15, 1
      %p79 = por %p77, %p78
      %p80 = scmp.ne.s32.totalorder %s72, %s75
      %p81 = scmp.eq.s32.totalorder %s15, 0
      %p82 = por %p80, %p81
      %p83 = scmp.ne.s32.totalorder %s72, %s75
      %p84 = scmp.eq.s32.totalorder %s20, 1
      %p85 = por %p83, %p84
      %p86 = scmp.ne.s32.totalorder %s75, %s76
      %p87 = scmp.eq.s32.totalorder %s20, 0
      %p88 = por %p86, %p87
      %p89 = scmp.ne.s32.totalorder %s75, %s76
      %p90 = scmp.eq.s32.totalorder %s21, 1
      %p91 = por %p89, %p90
      %p93 = scmp.ne.s32.totalorder %s76, %s92
      %p94 = scmp.eq.s32.totalorder %s21, 0
      %p95 = por %p93, %p94
      %p96 = scmp.le.s32.totalorder 1, %s15
      %p97 = scmp.lt.s32.totalorder %s15, 3
      %p98 = pnand %p96, %p97
      %p99 = pneg %p98
      // Predicated region
      $region9: #{tpu_custom_call.1} parent=5 // pred_check
        _
      $region10: #{tpu_custom_call.1} parent=5 // pred_check_branch
        %101 = sbr.rel (%p98) target = $region12
      $region11: #{tpu_custom_call.1} parent=5 // pred_region
        %s102 = ssub.s32 %s15, 1
        // Predicated region
        $region13: #{tpu_custom_call.1} parent=11 // pred_check
          %p103 = pneg %p62
        $region14: #{tpu_custom_call.1} parent=11 // pred_check_branch
          %105 = sbr.rel (%p103) target = $region16
        $region15: #{tpu_custom_call.1} parent=11 // pred_region
          %107 = vsyncadd [#allocation6], 0
          %s109 = sshll.u32 %s1, 4
          %s110 = int_to_ptr.hbm [resolvable:$true] %s109
          %s111 = sshll.u32 [#allocation5], 4
          %s112 = int_to_ptr.vmem [resolvable:$true] %s111
          %114 = dma.hbm_to_vmem [thread:$0]  %s110, 16, %s112, [#allocation6]
        $region16: #{tpu_custom_call.1} parent=11 // pred_fallthru
          _
      $region12: #{tpu_custom_call.1} parent=5 // pred_fallthru
        _
      %p115 = scmp.lt.s32.totalorder %s15, 2
      // Predicated region
      $region17: #{tpu_custom_call.1} parent=5 // pred_check
        %p116 = pneg %p115
      $region18: #{tpu_custom_call.1} parent=5 // pred_check_branch
        %118 = sbr.rel (%p116) target = $region20
      $region19: #{tpu_custom_call.1} parent=5 // pred_region
        // Predicated region
        $region21: #{tpu_custom_call.1} parent=19 // pred_check
          %p119 = pneg %p35
        $region22: #{tpu_custom_call.1} parent=19 // pred_check_branch
          %121 = sbr.rel (%p119) target = $region24
        $region23: #{tpu_custom_call.1} parent=19 // pred_region
          %s122 = sand.u32 %s25, 1
          %s123 = scalar_lea.sflag [#allocation3], %s122
          %s124 = sand.u32 %s25, 1
          %s125 = smul.addr %s124, 8
          %s126 = scalar_lea.vmem [#allocation2], %s125
          %128 = vsyncadd %s123, 0
          %s129 = smul.addr %s15, 8
          %s130 = scalar_lea.hbm %s0, %s129
          %s132 = sshll.u32 %s130, 4
          %s133 = int_to_ptr.hbm [resolvable:$true] %s132
          %s134 = sshll.u32 %s126, 4
          %s135 = int_to_ptr.vmem [resolvable:$true] %s134
          %137 = dma.hbm_to_vmem [thread:$0]  %s133, 128, %s135, %s123
        $region24: #{tpu_custom_call.1} parent=19 // pred_fallthru
          _
      $region20: #{tpu_custom_call.1} parent=5 // pred_fallthru
        _
      %p138 = scmp.le.s32.totalorder 1, %s15
      %p139 = scmp.lt.s32.totalorder %s15, 3
      %p140 = pnand %p138, %p139
      %p141 = pneg %p140
      // Predicated region
      $region25: #{tpu_custom_call.1} parent=5 // pred_check
        _
      $region26: #{tpu_custom_call.1} parent=5 // pred_check_branch
        %143 = sbr.rel (%p140) target = $region28
      $region27: #{tpu_custom_call.1} parent=5 // pred_region
        %s144 = ssub.s32 %s15, 1
        %s145 = sand.u32 %s28, 1
        %s146 = scalar_lea.sflag [#allocation3], %s145
        %s147 = sand.u32 %s28, 1
        %s148 = smul.addr %s147, 8
        %s149 = scalar_lea.vmem [#allocation2], %s148
        // Predicated region
        $region29: #{tpu_custom_call.1} parent=27 // pred_check
          %p150 = pneg %p41
        $region30: #{tpu_custom_call.1} parent=27 // pred_check_branch
          %152 = sbr.rel (%p150) target = $region32
        $region31: #{tpu_custom_call.1} parent=27 // pred_region
          %154 = dma.done %s146, 128
        $region32: #{tpu_custom_call.1} parent=27 // pred_fallthru
          _
        // Predicated region
        $region33: #{tpu_custom_call.1} parent=27 // pred_check
          %p155 = pneg %p62
        $region34: #{tpu_custom_call.1} parent=27 // pred_check_branch
          %157 = sbr.rel (%p155) target = $region36
        $region35: #{tpu_custom_call.1} parent=27 // pred_region
          %159 = dma.done [#allocation6], 16
        $region36: #{tpu_custom_call.1} parent=27 // pred_fallthru
          _
        %s160 = sand.u32 %s28, 1
        %s161 = scalar_lea.sflag [#allocation3], %s160
        %s162 = sand.u32 %s28, 1
        %s163 = smul.addr %s162, 8
        %s164 = scalar_lea.vmem [#allocation2], %s163
        %p165 = pneg %p41
        %p166 = pneg %p38
        %p167 = pneg %p62
        %p168 = pneg %p59
        %p169 = pneg %p88
        %p170 = pneg %p85
        %s171 = sand.u32 %s75, 1
        %s172 = scalar_lea.sflag [#allocation4], %s171
        %s173 = sand.u32 %s75, 1
        %s174 = smul.addr %s173, 8
        %s175 = scalar_lea.vmem [#allocation7], %s174
        %v176 = vld [vmem:[%s149] sm:$0xff]
        %v177 = vmul.f32 %v176, %v176
        %178 = vadd.xlane.f32.xlu0 %v177
        %v179 = vpop.xlane.xlu0 %178
        %v180 = vmul.f32 %v179, 0.0078125
        %v181 = vadd.f32 %v180, 1e-05
        %v182 = vrsqrt.pop %v181
        %v183 = vmul.f32 %v182, %v181
        %v184 = vmul.f32 %v183, %v182
        %v185 = vmul.f32 0.5, %v184
        %v186 = vsub.f32 1.5, %v185
        %v187 = vmul.f32 %v182, %v186
        %vm188 = vweird.f32 %v181
        %vm189 = vweird.f32 %v182
        %vm190 = vmor %vm188, %vm189
        %v191 = vsel %vm190, %v182, %v187
        %v192 = vmul.f32 %v176, %v191
        %v193 = vld [vmem:[#allocation5] sm:$0x1]
        %v195 = vperm.slane %v193, 0
        %v197 = vmul.f32 %v192, %v195
        %198 = vst [vmem:[%s175] sm:$0xff] %v197
        %s199 = sand.u32 %s75, 1
        %s200 = scalar_lea.sflag [#allocation4], %s199
        %s201 = sand.u32 %s75, 1
        %s202 = smul.addr %s201, 8
        %s203 = scalar_lea.vmem [#allocation7], %s202
        // Predicated region
        $region37: #{tpu_custom_call.1} parent=27 // pred_check
          %p204 = pneg %p85
        $region38: #{tpu_custom_call.1} parent=27 // pred_check_branch
          %206 = sbr.rel (%p204) target = $region40
        $region39: #{tpu_custom_call.1} parent=27 // pred_region
          %208 = vsyncadd %s200, 0
          %s209 = smul.addr %s20, 8
          %s210 = scalar_lea.hbm %s2, %s209
          %s212 = sshll.u32 %s203, 4
          %s213 = int_to_ptr.vmem [resolvable:$true] %s212
          %s214 = sshll.u32 %s210, 4
          %s215 = int_to_ptr.hbm [resolvable:$true] %s214
          %217 = dma.vmem_to_hbm [thread:$0]  %s213, 128, %s215, %s200
        $region40: #{tpu_custom_call.1} parent=27 // pred_fallthru
          _
      $region28: #{tpu_custom_call.1} parent=5 // pred_fallthru
        _
      %p218 = scmp.le.s32.totalorder 2, %s15
      // Predicated region
      $region41: #{tpu_custom_call.1} parent=5 // pred_check
        %p219 = pneg %p218
      $region42: #{tpu_custom_call.1} parent=5 // pred_check_branch
        %221 = sbr.rel (%p219) target = $region44
      $region43: #{tpu_custom_call.1} parent=5 // pred_region
        %s222 = ssub.s32 %s15, 2
        // Predicated region
        $region45: #{tpu_custom_call.1} parent=43 // pred_check
          %p223 = pneg %p91
        $region46: #{tpu_custom_call.1} parent=43 // pred_check_branch
          %225 = sbr.rel (%p223) target = $region48
        $region47: #{tpu_custom_call.1} parent=43 // pred_region
          %s226 = sand.u32 %s76, 1
          %s227 = scalar_lea.sflag [#allocation4], %s226
          %s228 = sand.u32 %s76, 1
          %s229 = smul.addr %s228, 8
          %s230 = scalar_lea.vmem [#allocation7], %s229
          %232 = dma.done %s227, 128
        $region48: #{tpu_custom_call.1} parent=43 // pred_fallthru
          _
      $region44: #{tpu_custom_call.1} parent=5 // pred_fallthru
        _
    $region6: #{tpu_custom_call.1} parent=1 // loop_footer
      %s19 = sadd.s32 1, %s15
    $region7: #{tpu_custom_call.1} parent=1 // loop_footer_branch
      %14 = sbr.rel target = $region3
    $region8: #{tpu_custom_call.1} parent=1 // loop_exit
      _
    %233 = vsyncpa [#allocation3], 1
    %s234 = scalar_lea.sflag [#allocation3], 1
    %235 = vsyncpa %s234, 1
    %236 = vsyncpa [#allocation6], 1
    %237 = vsyncpa [#allocation4], 1
    %s238 = scalar_lea.sflag [#allocation4], 1
    %239 = vsyncpa %s238, 1

</llo_original>
